<compile_context>
chip_gen: v7x
topology: tpu7x:2x2x1
jax: 0.10.0
libtpu: 0.0.40
codegen_flags: <defaults>
</compile_context>

<pallas_src>
import functools

import jax
import jax.numpy as jnp
import numpy as np
from jax.experimental import pallas as pl
from jax.experimental.pallas import tpu as pltpu


def _round_up(x, m):
    return -(-x // m) * m


def _vmem_capacity_bytes():
    """Physical VMEM per TensorCore; conservative fallback if the query fails."""
    try:
        return int(pltpu.get_tpu_info().vmem_capacity_bytes)
    except Exception:
        return 64 << 20          # v7x is the smallest (64 MiB / TC)


def _mm_operands(q, k, inv_T, bf16_negatives=False):
    """MXU operands for the negatives matmul, with 1/T folded into q.

    bf16 inputs stay bf16 (full-rate MXU, f32 accumulation). f32 inputs stay
    f32 unless bf16_negatives=True (optional speedup on v5e/v6e; ~1e-3-level
    logit change, so off by default). The positive logit never goes through
    this path -- it is computed from f32 upcasts of the raw inputs."""
    if q.dtype == jnp.bfloat16 or bf16_negatives:
        q_mm = (q.astype(jnp.float32) * inv_T).astype(jnp.bfloat16)
        k_mm = k.astype(jnp.bfloat16)
    else:
        q_mm = q.astype(jnp.float32) * inv_T
        k_mm = k.astype(jnp.float32)
    return q_mm, k_mm


# --------------------------------------------------------------------------
# Kernels
# --------------------------------------------------------------------------

def _patch_nce_small_kernel(q_ref, k_ref, loss_ref, *, nce_T, bf16_negatives):
    # q_ref, k_ref: (B, P, D) in VMEM; loss_ref: (B, P) (lane-dense output).
    inv_T = jnp.float32(1.0 / nce_T)
    q = q_ref[...]
    k = k_ref[...]

    # Positive logit straight from f32 upcasts of the raw inputs, scaled once.
    pos = jnp.sum(q.astype(jnp.float32) * k.astype(jnp.float32),
                  axis=-1, keepdims=True) * inv_T                 # (B, P, 1)

    # Unmasked similarities, contraction over D on both operands (no explicit
    # k.T); 1/T folded into q_mm; f32 accumulation on the MXU.
    q_mm, k_mm = _mm_operands(q, k, inv_T, bf16_negatives)
    s = jnp.einsum('bpd,bqd->bpq', q_mm, k_mm,
                   preferred_element_type=jnp.float32)            # (B, P, P)

    # No diagonal masking: diag(s) == pos, so the reference logsumexp over
    # [pos, negatives-with-diag=-10] equals
    #   m + log(rowsum(exp(s - m)) + exp(-10/T - m)).
    m = jnp.maximum(pos, jnp.max(s, axis=-1, keepdims=True))      # (B, P, 1)
    sumexp = (jnp.sum(jnp.exp(s - m), axis=-1, keepdims=True)
              + jnp.exp(jnp.float32(-10.0) * inv_T - m))          # (B, P, 1)
    loss = -pos + m + jnp.log(sumexp)                             # (B, P, 1)

    loss_ref[...] = loss[:, :, 0]                                 # (B, P)


def _patch_nce_tiled_kernel(q_ref, k_ref, loss_ref, m_sc, l_sc, pos_sc, *,
                            nce_T, bf16_negatives):
    # q_ref:    (1, T, D) query tile (block index constant over the key axis,
    #           so it is DMA'd once per (b, t)).
    # k_ref:    (1, T, D) current key tile.
    # loss_ref: (1, 1, T) lane-dense output block, written at the last key tile.
    # Scratch (persists across the key axis): m_sc / l_sc / pos_sc, (T, 1) f32.
    t = pl.program_id(1)
    kt = pl.program_id(2)
    nk = pl.num_programs(2)
    inv_T = jnp.float32(1.0 / nce_T)

    q = q_ref[0]                                                  # (T, D)
    k = k_ref[0]                                                  # (T, D)

    @pl.when(kt == 0)
    def _init():
        m_sc[...] = jnp.full_like(m_sc, -jnp.inf)
        l_sc[...] = jnp.zeros_like(l_sc)

    # Query and key tiles are the same size, so key tile kt == t holds exactly
    # this tile's positive keys -> no separate "positive keys" input stream.
    @pl.when(kt == t)
    def _positives():
        pos_sc[...] = jnp.sum(q.astype(jnp.float32) * k.astype(jnp.float32),
                              axis=-1, keepdims=True) * inv_T     # (T, 1)

    q_mm, k_mm = _mm_operands(q, k, inv_T, bf16_negatives)
    s = jnp.einsum('qd,kd->qk', q_mm, k_mm,
                   preferred_element_type=jnp.float32)            # (T, T), /T

    # Online logsumexp across key tiles; no diagonal masking (diag(s) == pos).
    m_prev = m_sc[...]
    m_new = jnp.maximum(m_prev, jnp.max(s, axis=-1, keepdims=True))
    l_sc[...] = (jnp.exp(m_prev - m_new) * l_sc[...]
                 + jnp.sum(jnp.exp(s - m_new), axis=-1, keepdims=True))
    m_sc[...] = m_new

    @pl.when(kt == nk - 1)
    def _finalize():
        pos = pos_sc[...]
        m = jnp.maximum(m_sc[...], pos)   # guard: MXU diag vs VPU pos rounding
        sumexp = (l_sc[...] * jnp.exp(m_sc[...] - m)
                  + jnp.exp(jnp.float32(-10.0) * inv_T - m))
        loss = -pos + m + jnp.log(sumexp)                         # (T, 1)
        loss_ref[0, 0, :] = loss[:, 0]


# --------------------------------------------------------------------------
# VMEM sizing / tile choice (lane-padding aware)
# --------------------------------------------------------------------------

def _tiled_vmem_bytes(t, d_pad, itemsize):
    blocks = 2 * 2 * t * d_pad * itemsize       # double-buffered q & k tiles
    upcast = 2 * t * d_pad * 4                  # matmul-operand copies
    sim = 3 * t * t * 4                         # s, exp(s - m), headroom
    scratch = 3 * t * 128 * 4                   # m/l/pos (T, 1), lane-padded
    out = 2 * 8 * t * 4                         # (1, 1, T) block, sublane-padded
    return blocks + upcast + sim + scratch + out + (1 << 20)


def _choose_tile(P, d_pad, itemsize, vmem_cap):
    """Largest 128-multiple tile dividing P whose footprint fits ~40% of VMEM
    (bigger tiles on 128 MiB parts, bounded tiles on v7x's 64 MiB/TC)."""
    budget = int(0.4 * vmem_cap)
    for cand in (1024, 512, 256, 128):
        if P % cand == 0 and _tiled_vmem_bytes(cand, d_pad, itemsize) <= budget:
            return cand
    return 128


def _small_vmem_bytes(B, P, d_pad, itemsize):
    p_s = _round_up(P, 8)
    p_l = _round_up(P, 128)
    sim = 3 * B * p_s * p_l * 4                 # s, exp(s - m), headroom
    inputs = 2 * B * p_s * d_pad * (itemsize + 4)
    out = B * p_l * 4
    return sim + inputs + out


# --------------------------------------------------------------------------
# Wrapper
# --------------------------------------------------------------------------

def patch_nce_loss(feat_q, feat_k, *, batch_size, nce_T,
                   nce_includes_all_negatives_from_minibatch=False,
                   tile=None, bf16_negatives=False):
    """Pallas implementation of PatchNCELoss.forward.

    feat_q, feat_k: (N, D) with N = batch_size * n_patches.
    Returns: (N,) float32 per-sample cross-entropy loss (reduction='none').
    """
    N, D = feat_q.shape
    B = 1 if nce_includes_all_negatives_from_minibatch else batch_size
    assert N % B == 0, "num_patches must be divisible by the bmm batch dim"
    P = N // B

    feat_k = jax.lax.stop_gradient(feat_k)   # feat_k.detach()
    q3 = feat_q.reshape(B, P, D)
    k3 = feat_k.reshape(B, P, D)

    itemsize = feat_q.dtype.itemsize
    d_pad = _round_up(D, 128)                # lane padding for narrow D
    vmem_cap = _vmem_capacity_bytes()
    vmem_ceiling = int(0.85 * vmem_cap)      # headroom for compiler scratch

    est_small = _small_vmem_bytes(B, P, d_pad, itemsize)
    # Small problems: per-grid-step overhead dominates; run grid-less. The
    # threshold is low so mid-size work takes the grid path (megacore). P not
    # a multiple of 128 cannot be query/key tiled, so it also lands here.
    use_small = tile is None and (P % 128 != 0 or est_small <= (4 << 20))

    if use_small:
        vmem_bytes = min(vmem_ceiling, max(32 << 20, 4 * est_small))
        loss = pl.pallas_call(
            functools.partial(_patch_nce_small_kernel, nce_T=nce_T,
                              bf16_negatives=bf16_negatives),
            out_shape=jax.ShapeDtypeStruct((B, P), jnp.float32),
            in_specs=[pl.BlockSpec(memory_space=pltpu.MemorySpace.VMEM),
                      pl.BlockSpec(memory_space=pltpu.MemorySpace.VMEM)],
            out_specs=pl.BlockSpec(memory_space=pltpu.MemorySpace.VMEM),
            compiler_params=pltpu.CompilerParams(vmem_limit_bytes=vmem_bytes),
        )(q3, k3)
        return loss.reshape(N)

    # Tiled path: grid (B, P//T, P//T) with equal query/key tiles. Live VMEM is
    # bounded by T regardless of P (online logsumexp across the key axis). Key
    # (reduction) axis is last and 'arbitrary'; B and the query-tile axis are
    # 'parallel' so both v7x TensorCores get work even at B == 1.
    t_tile = tile if tile is not None else _choose_tile(P, d_pad, itemsize, vmem_cap)
    assert t_tile == P or (P % t_tile == 0 and t_tile % 128 == 0), \
        "tile must divide n_patches and be a multiple of 128 (or equal it)"

    est = _tiled_vmem_bytes(t_tile, d_pad, itemsize)
    vmem_bytes = min(vmem_ceiling, max(32 << 20, 2 * est))
    nt = P // t_tile

    loss = pl.pallas_call(
        functools.partial(_patch_nce_tiled_kernel, nce_T=nce_T,
                          bf16_negatives=bf16_negatives),
        out_shape=jax.ShapeDtypeStruct((B, 1, P), jnp.float32),
        grid=(B, nt, nt),
        in_specs=[
            pl.BlockSpec((1, t_tile, D), lambda b, t, kt: (b, t, 0)),   # queries
            pl.BlockSpec((1, t_tile, D), lambda b, t, kt: (b, kt, 0)),  # keys
        ],
        out_specs=pl.BlockSpec((1, 1, t_tile), lambda b, t, kt: (b, 0, t)),
        scratch_shapes=[pltpu.VMEM((t_tile, 1), jnp.float32),   # running max
                        pltpu.VMEM((t_tile, 1), jnp.float32),   # running sumexp
                        pltpu.VMEM((t_tile, 1), jnp.float32)],  # positive logit
        compiler_params=pltpu.CompilerParams(
            dimension_semantics=("parallel", "parallel", "arbitrary"),
            vmem_limit_bytes=vmem_bytes),
    )(q3, k3)
    return loss.reshape(N)


def _reference_patch_nce_loss(feat_q, feat_k, *, batch_size, nce_T,
                              nce_includes_all_negatives_from_minibatch=False):
    """Pure-JAX reference mirroring the PyTorch code."""
    N, D = feat_q.shape
    l_pos = jnp.sum(feat_q * feat_k, axis=1, keepdims=True)           # (N, 1)
    B = 1 if nce_includes_all_negatives_from_minibatch else batch_size
    P = N // B
    q = feat_q.reshape(B, P, D)
    k = feat_k.reshape(B, P, D)
    l_neg = jnp.einsum('bpd,bqd->bpq', q, k)                          # (B, P, P)
    eye = jnp.eye(P, dtype=bool)[None]
    l_neg = jnp.where(eye, -10.0, l_neg).reshape(N, P)
    out = jnp.concatenate([l_pos, l_neg], axis=1) / nce_T             # (N, P+1)
    return -out[:, 0] + jax.scipy.special.logsumexp(out, axis=1)


if __name__ == "__main__":
    # opt: batch_size=2, nce_T=0.07, nce_includes_all_negatives_from_minibatch=False
    batch_size = 2
    n_patches = 128
    dim = 32
    nce_T = 0.07

    key = jax.random.PRNGKey(0)
    kq, kk = jax.random.split(key)
    N = batch_size * n_patches
    feat_q = jax.random.normal(kq, (N, dim), dtype=jnp.float32)
    feat_k = jax.random.normal(kk, (N, dim), dtype=jnp.float32)

    # 1/T ~ 14.3 amplifies f32 matmul rounding, and the kernel's diagonal term
    # comes from the MXU while the reference uses the exact elementwise dot;
    # keep a small absolute slack on top of the relative tolerance.
    tol = dict(rtol=1e-4, atol=2e-4)

    # 1) Default mode (per-image negatives) -> grid-less small path.
    loss = patch_nce_loss(feat_q, feat_k, batch_size=batch_size, nce_T=nce_T)
    loss = jax.block_until_ready(loss)
    ref = _reference_patch_nce_loss(feat_q, feat_k, batch_size=batch_size,
                                    nce_T=nce_T)
    np.testing.assert_allclose(np.asarray(loss), np.asarray(ref), **tol)

    # 2) All-negatives-from-minibatch mode (B=1, P=N) -> still small here.
    loss_all = patch_nce_loss(feat_q, feat_k, batch_size=batch_size, nce_T=nce_T,
                              nce_includes_all_negatives_from_minibatch=True)
    loss_all = jax.block_until_ready(loss_all)
    ref_all = _reference_patch_nce_loss(
        feat_q, feat_k, batch_size=batch_size, nce_T=nce_T,
        nce_includes_all_negatives_from_minibatch=True)
    np.testing.assert_allclose(np.asarray(loss_all), np.asarray(ref_all), **tol)

    # 3) Exercise the tiled path with multiple key tiles: B=1, P=256, T=128
    #    -> grid (1, 2, 2), online logsumexp across the key axis.
    loss_tiled = patch_nce_loss(feat_q, feat_k, batch_size=batch_size, nce_T=nce_T,
                                nce_includes_all_negatives_from_minibatch=True,
                                tile=128)
    loss_tiled = jax.block_until_ready(loss_tiled)
    np.testing.assert_allclose(np.asarray(loss_tiled), np.asarray(ref_all), **tol)

    # 4) Tiled path with a single key tile per query tile (B=2, P=T=128):
    #    init / positives / finalize all happen in one grid step.
    loss_t2 = patch_nce_loss(feat_q, feat_k, batch_size=batch_size, nce_T=nce_T,
                             tile=128)
    loss_t2 = jax.block_until_ready(loss_t2)
    np.testing.assert_allclose(np.asarray(loss_t2), np.asarray(ref), **tol)

    print("KERNEL_OK")
</pallas_src>

<mosaic_0001>
module attributes {stable_mosaic.version = 11 : i64} {
  func.func @_patch_nce_small_kernel(%arg0: memref<2x128x32xf32, #tpu.memory_space<vmem>>, %arg1: memref<2x128x32xf32, #tpu.memory_space<vmem>>, %arg2: memref<2x128xf32, #tpu.memory_space<vmem>>) attributes {dimension_semantics = [], scalar_prefetch = 0 : i64, scratch_operands = 0 : i64, tpu.core_type = #tpu.core_type<tc>} {
    %c0 = arith.constant 0 : index
    %c0_0 = arith.constant 0 : index
    %c0_1 = arith.constant 0 : index
    %0 = vector.load %arg0[%c0, %c0_0, %c0_1] : memref<2x128x32xf32, #tpu.memory_space<vmem>>, vector<2x128x32xf32>
    %c0_2 = arith.constant 0 : index
    %c0_3 = arith.constant 0 : index
    %c0_4 = arith.constant 0 : index
    %1 = vector.load %arg1[%c0_2, %c0_3, %c0_4] : memref<2x128x32xf32, #tpu.memory_space<vmem>>, vector<2x128x32xf32>
    %2 = arith.mulf %0, %1 : vector<2x128x32xf32>
    %cst = arith.constant dense<0.000000e+00> : vector<2x128xf32>
    %3 = vector.multi_reduction <add>, %2, %cst [2] : vector<2x128x32xf32> to vector<2x128xf32>
    %4 = vector.shape_cast %3 : vector<2x128xf32> to vector<2x128x1xf32>
    %cst_5 = arith.constant 14.2857141 : f32
    %5 = vector.broadcast %cst_5 : f32 to vector<2x128x1xf32>
    %6 = arith.mulf %4, %5 : vector<2x128x1xf32>
    %cst_6 = arith.constant 14.2857141 : f32
    %7 = vector.broadcast %cst_6 : f32 to vector<2x128x32xf32>
    %8 = arith.mulf %0, %7 : vector<2x128x32xf32>
    "tpu.trace_start"() <{level = 10 : i32, message = "bpd,bqd->bpq"}> : () -> ()
    %cst_7 = arith.constant dense<0.000000e+00> : vector<2x128x128xf32>
    %9 = tpu.matmul %8, %1, %cst_7 {dimension_numbers = #tpu.dot_dimension_numbers<[2], [2], [1], [1], [0, 0, 0, 1, 1, 1], [0], [0]>} : vector<2x128x32xf32>, vector<2x128x32xf32>, vector<2x128x128xf32> -> vector<2x128x128xf32>
    "tpu.trace_stop"() : () -> ()
    %cst_8 = arith.constant dense<0xFF800000> : vector<2x128xf32>
    %10 = vector.multi_reduction <maximumf>, %9, %cst_8 [2] : vector<2x128x128xf32> to vector<2x128xf32>
    %11 = vector.shape_cast %10 : vector<2x128xf32> to vector<2x128x1xf32>
    %12 = arith.maximumf %6, %11 : vector<2x128x1xf32>
    %13 = vector.broadcast %12 : vector<2x128x1xf32> to vector<2x128x128xf32>
    %14 = arith.subf %9, %13 : vector<2x128x128xf32>
    %15 = math.exp %14 : vector<2x128x128xf32>
    %cst_9 = arith.constant dense<0.000000e+00> : vector<2x128xf32>
    %16 = vector.multi_reduction <add>, %15, %cst_9 [2] : vector<2x128x128xf32> to vector<2x128xf32>
    %17 = vector.shape_cast %16 : vector<2x128xf32> to vector<2x128x1xf32>
    %cst_10 = arith.constant -1.000000e+01 : f32
    %cst_11 = arith.constant 14.2857141 : f32
    %18 = arith.mulf %cst_10, %cst_11 : f32
    %19 = vector.broadcast %18 : f32 to vector<2x128x1xf32>
    %20 = arith.subf %19, %12 : vector<2x128x1xf32>
    %21 = math.exp %20 : vector<2x128x1xf32>
    %22 = arith.addf %17, %21 : vector<2x128x1xf32>
    %cst_12 = arith.constant 0.000000e+00 : f32
    %23 = vector.broadcast %cst_12 : f32 to vector<2x128x1xf32>
    %24 = arith.subf %23, %6 : vector<2x128x1xf32>
    %25 = arith.addf %24, %12 : vector<2x128x1xf32>
    %26 = math.log %22 : vector<2x128x1xf32>
    %27 = arith.addf %25, %26 : vector<2x128x1xf32>
    %28 = vector.shape_cast %27 : vector<2x128x1xf32> to vector<2x128xf32>
    %c0_13 = arith.constant 0 : index
    %c0_14 = arith.constant 0 : index
    %29 = vector.load %arg2[%c0_13, %c0_14] : memref<2x128xf32, #tpu.memory_space<vmem>>, vector<2x128xf32>
    tpu.vector_store %arg2[%c0_13, %c0_14], %28 {strides = array<i32>} : memref<2x128xf32, #tpu.memory_space<vmem>>, vector<2x128xf32>,
    return
  }
}

</mosaic_0001>

<llo_original>
// kernel: tpu_custom_call.1
$region0: #{tpu_custom_call.1}
  #allocation0 [shape = 'u32[]', space=smem, size = 0x4, offset = 0x4, fixed_abs, tag = 'smem constant byte address 0x4 - core index']
  #allocation1 [shape = 'u32[144,128]{1,0:T(1,128)}', space=vmem, size = 0x12000, scoped, tag = 'internal scratch']
  %s0 = inlined_call_operand.vmem [shape: f32[2,128,32], index: 0, kind: input, shape index: {}]
  %s1 = inlined_call_operand.vmem [shape: f32[2,128,32], index: 1, kind: input, shape index: {}]
  %s2 = inlined_call_operand.hbm [shape: f32[2,128], index: 2, kind: output, shape index: {}]
  %s3 = sld [smem:[#allocation0]]
  $region18: #{tpu_custom_call.1} parent=0
    _
  %s5 = ssub.s32 1, %s3
  %s6 = scalar_select 0, %s5, %s3
  $region1: #{tpu_custom_call.1} parent=0
    #allocation2 [shape = 'u8[1024]{0}', space=vmem, size = 0x400, scoped, tag = 'output window, operand 0, single buffered']
    #allocation3 [shape = 's32[1]{0}', space=sflag, size = 0x4, scoped, tag = 'scoped memory for tpu_custom_call.1']
    %7 = vsyncpa [#allocation3], 0
    // Predicated region
    $region2: #{tpu_custom_call.1} parent=1 // pred_check
      _
    $region3: #{tpu_custom_call.1} parent=1 // pred_check_branch
      %9 = sbr.rel (0) target = $region5
    $region4: #{tpu_custom_call.1} parent=1 // pred_region
      _
    $region5: #{tpu_custom_call.1} parent=1 // pred_fallthru
      _
    // Predicated region
    $region6: #{tpu_custom_call.1} parent=1 // pred_check
      _
    $region7: #{tpu_custom_call.1} parent=1 // pred_check_branch
      %11 = sbr.rel (0) target = $region9
    $region8: #{tpu_custom_call.1} parent=1 // pred_region
      _
    $region9: #{tpu_custom_call.1} parent=1 // pred_fallthru
      _
    %v12 = vld [vmem:[%s0] sm:$0xff]
    %v13 = vld [vmem:[%s0 + $0x8] sm:$0xff]
    %v14 = vld [vmem:[%s0 + $0x10] sm:$0xff]
    %v15 = vld [vmem:[%s0 + $0x18] sm:$0xff]
    %v16 = vld [vmem:[%s0 + $0x20] sm:$0xff]
    %v17 = vld [vmem:[%s0 + $0x28] sm:$0xff]
    %v18 = vld [vmem:[%s0 + $0x30] sm:$0xff]
    %v19 = vld [vmem:[%s0 + $0x38] sm:$0xff]
    %v20 = vld [vmem:[%s0 + $0x40] sm:$0xff]
    %v21 = vld [vmem:[%s0 + $0x48] sm:$0xff]
    %v22 = vld [vmem:[%s0 + $0x50] sm:$0xff]
    %v23 = vld [vmem:[%s0 + $0x58] sm:$0xff]
    %v24 = vld [vmem:[%s0 + $0x60] sm:$0xff]
    %v25 = vld [vmem:[%s0 + $0x68] sm:$0xff]
    %v26 = vld [vmem:[%s0 + $0x70] sm:$0xff]
    %v27 = vld [vmem:[%s0 + $0x78] sm:$0xff]
    %v28 = vld [vmem:[%s0 + $0x80] sm:$0xff]
    %v29 = vld [vmem:[%s0 + $0x88] sm:$0xff]
    %v30 = vld [vmem:[%s0 + $0x90] sm:$0xff]
    %v31 = vld [vmem:[%s0 + $0x98] sm:$0xff]
    %v32 = vld [vmem:[%s0 + $0xa0] sm:$0xff]
    %v33 = vld [vmem:[%s0 + $0xa8] sm:$0xff]
    %v34 = vld [vmem:[%s0 + $0xb0] sm:$0xff]
    %v35 = vld [vmem:[%s0 + $0xb8] sm:$0xff]
    %v36 = vld [vmem:[%s0 + $0xc0] sm:$0xff]
    %v37 = vld [vmem:[%s0 + $0xc8] sm:$0xff]
    %v38 = vld [vmem:[%s0 + $0xd0] sm:$0xff]
    %v39 = vld [vmem:[%s0 + $0xd8] sm:$0xff]
    %v40 = vld [vmem:[%s0 + $0xe0] sm:$0xff]
    %v41 = vld [vmem:[%s0 + $0xe8] sm:$0xff]
    %v42 = vld [vmem:[%s0 + $0xf0] sm:$0xff]
    %v43 = vld [vmem:[%s0 + $0xf8] sm:$0xff]
    %v44 = vld [vmem:[%s1] sm:$0xff]
    %v45 = vld [vmem:[%s1 + $0x8] sm:$0xff]
    %v46 = vld [vmem:[%s1 + $0x10] sm:$0xff]
    %v47 = vld [vmem:[%s1 + $0x18] sm:$0xff]
    %v48 = vld [vmem:[%s1 + $0x20] sm:$0xff]
    %v49 = vld [vmem:[%s1 + $0x28] sm:$0xff]
    %v50 = vld [vmem:[%s1 + $0x30] sm:$0xff]
    %v51 = vld [vmem:[%s1 + $0x38] sm:$0xff]
    %v52 = vld [vmem:[%s1 + $0x40] sm:$0xff]
    %v53 = vld [vmem:[%s1 + $0x48] sm:$0xff]
    %v54 = vld [vmem:[%s1 + $0x50] sm:$0xff]
    %v55 = vld [vmem:[%s1 + $0x58] sm:$0xff]
    %v56 = vld [vmem:[%s1 + $0x60] sm:$0xff]
    %v57 = vld [vmem:[%s1 + $0x68] sm:$0xff]
    %v58 = vld [vmem:[%s1 + $0x70] sm:$0xff]
    %v59 = vld [vmem:[%s1 + $0x78] sm:$0xff]
    %v60 = vld [vmem:[%s1 + $0x80] sm:$0xff]
    %v61 = vld [vmem:[%s1 + $0x88] sm:$0xff]
    %v62 = vld [vmem:[%s1 + $0x90] sm:$0xff]
    %v63 = vld [vmem:[%s1 + $0x98] sm:$0xff]
    %v64 = vld [vmem:[%s1 + $0xa0] sm:$0xff]
    %v65 = vld [vmem:[%s1 + $0xa8] sm:$0xff]
    %v66 = vld [vmem:[%s1 + $0xb0] sm:$0xff]
    %v67 = vld [vmem:[%s1 + $0xb8] sm:$0xff]
    %v68 = vld [vmem:[%s1 + $0xc0] sm:$0xff]
    %v69 = vld [vmem:[%s1 + $0xc8] sm:$0xff]
    %v70 = vld [vmem:[%s1 + $0xd0] sm:$0xff]
    %v71 = vld [vmem:[%s1 + $0xd8] sm:$0xff]
    %v72 = vld [vmem:[%s1 + $0xe0] sm:$0xff]
    %v73 = vld [vmem:[%s1 + $0xe8] sm:$0xff]
    %v74 = vld [vmem:[%s1 + $0xf0] sm:$0xff]
    %v75 = vld [vmem:[%s1 + $0xf8] sm:$0xff]
    %v76 = vmul.f32 %v12, %v44
    %v77 = vmul.f32 %v13, %v45
    %v78 = vmul.f32 %v14, %v46
    %v79 = vmul.f32 %v15, %v47
    %v80 = vmul.f32 %v16, %v48
    %v81 = vmul.f32 %v17, %v49
    %v82 = vmul.f32 %v18, %v50
    %v83 = vmul.f32 %v19, %v51
    %v84 = vmul.f32 %v20, %v52
    %v85 = vmul.f32 %v21, %v53
    %v86 = vmul.f32 %v22, %v54
    %v87 = vmul.f32 %v23, %v55
    %v88 = vmul.f32 %v24, %v56
    %v89 = vmul.f32 %v25, %v57
    %v90 = vmul.f32 %v26, %v58
    %v91 = vmul.f32 %v27, %v59
    %v92 = vmul.f32 %v28, %v60
    %v93 = vmul.f32 %v29, %v61
    %v94 = vmul.f32 %v30, %v62
    %v95 = vmul.f32 %v31, %v63
    %v96 = vmul.f32 %v32, %v64
    %v97 = vmul.f32 %v33, %v65
    %v98 = vmul.f32 %v34, %v66
    %v99 = vmul.f32 %v35, %v67
    %v100 = vmul.f32 %v36, %v68
    %v101 = vmul.f32 %v37, %v69
    %v102 = vmul.f32 %v38, %v70
    %v103 = vmul.f32 %v39, %v71
    %v104 = vmul.f32 %v40, %v72
    %v105 = vmul.f32 %v41, %v73
    %v106 = vmul.f32 %v42, %v74
    %v107 = vmul.f32 %v43, %v75
    %vm108 = vcmask 261120
    %v109 = vsel %vm108, %v76, 0.0
    %110 = vadd.xlane.f32.xlu0 %v109
    %v111 = vpop.xlane.xlu0 %110
    %v112 = vsel %vm108, %v77, 0.0
    %113 = vadd.xlane.f32.xlu0 %v112
    %v114 = vpop.xlane.xlu0 %113
    %v115 = vsel %vm108, %v78, 0.0
    %116 = vadd.xlane.f32.xlu0 %v115
    %v117 = vpop.xlane.xlu0 %116
    %v118 = vsel %vm108, %v79, 0.0
    %119 = vadd.xlane.f32.xlu0 %v118
    %v120 = vpop.xlane.xlu0 %119
    %v121 = vsel %vm108, %v80, 0.0
    %122 = vadd.xlane.f32.xlu0 %v121
    %v123 = vpop.xlane.xlu0 %122
    %v124 = vsel %vm108, %v81, 0.0
    %125 = vadd.xlane.f32.xlu0 %v124
    %v126 = vpop.xlane.xlu0 %125
    %v127 = vsel %vm108, %v82, 0.0
    %128 = vadd.xlane.f32.xlu0 %v127
    %v129 = vpop.xlane.xlu0 %128
    %v130 = vsel %vm108, %v83, 0.0
    %131 = vadd.xlane.f32.xlu0 %v130
    %v132 = vpop.xlane.xlu0 %131
    %v133 = vsel %vm108, %v84, 0.0
    %134 = vadd.xlane.f32.xlu0 %v133
    %v135 = vpop.xlane.xlu0 %134
    %v136 = vsel %vm108, %v85, 0.0
    %137 = vadd.xlane.f32.xlu0 %v136
    %v138 = vpop.xlane.xlu0 %137
    %v139 = vsel %vm108, %v86, 0.0
    %140 = vadd.xlane.f32.xlu0 %v139
    %v141 = vpop.xlane.xlu0 %140
    %v142 = vsel %vm108, %v87, 0.0
    %143 = vadd.xlane.f32.xlu0 %v142
    %v144 = vpop.xlane.xlu0 %143
    %v145 = vsel %vm108, %v88, 0.0
    %146 = vadd.xlane.f32.xlu0 %v145
    %v147 = vpop.xlane.xlu0 %146
    %v148 = vsel %vm108, %v89, 0.0
    %149 = vadd.xlane.f32.xlu0 %v148
    %v150 = vpop.xlane.xlu0 %149
    %v151 = vsel %vm108, %v90, 0.0
    %152 = vadd.xlane.f32.xlu0 %v151
    %v153 = vpop.xlane.xlu0 %152
    %v154 = vsel %vm108, %v91, 0.0
    %155 = vadd.xlane.f32.xlu0 %v154
    %v156 = vpop.xlane.xlu0 %155
    %v157 = vsel %vm108, %v92, 0.0
    %158 = vadd.xlane.f32.xlu0 %v157
    %v159 = vpop.xlane.xlu0 %158
    %v160 = vsel %vm108, %v93, 0.0
    %161 = vadd.xlane.f32.xlu0 %v160
    %v162 = vpop.xlane.xlu0 %161
    %v163 = vsel %vm108, %v94, 0.0
    %164 = vadd.xlane.f32.xlu0 %v163
    %v165 = vpop.xlane.xlu0 %164
    %v166 = vsel %vm108, %v95, 0.0
    %167 = vadd.xlane.f32.xlu0 %v166
    %v168 = vpop.xlane.xlu0 %167
    %v169 = vsel %vm108, %v96, 0.0
    %170 = vadd.xlane.f32.xlu0 %v169
    %v171 = vpop.xlane.xlu0 %170
    %v172 = vsel %vm108, %v97, 0.0
    %173 = vadd.xlane.f32.xlu0 %v172
    %v174 = vpop.xlane.xlu0 %173
    %v175 = vsel %vm108, %v98, 0.0
    %176 = vadd.xlane.f32.xlu0 %v175
    %v177 = vpop.xlane.xlu0 %176
    %v178 = vsel %vm108, %v99, 0.0
    %179 = vadd.xlane.f32.xlu0 %v178
    %v180 = vpop.xlane.xlu0 %179
    %v181 = vsel %vm108, %v100, 0.0
    %182 = vadd.xlane.f32.xlu0 %v181
    %v183 = vpop.xlane.xlu0 %182
    %v184 = vsel %vm108, %v101, 0.0
    %185 = vadd.xlane.f32.xlu0 %v184
    %v186 = vpop.xlane.xlu0 %185
    %v187 = vsel %vm108, %v102, 0.0
    %188 = vadd.xlane.f32.xlu0 %v187
    %v189 = vpop.xlane.xlu0 %188
    %v190 = vsel %vm108, %v103, 0.0
    %191 = vadd.xlane.f32.xlu0 %v190
    %v192 = vpop.xlane.xlu0 %191
    %v193 = vsel %vm108, %v104, 0.0
    %194 = vadd.xlane.f32.xlu0 %v193
    %v195 = vpop.xlane.xlu0 %194
    %v196 = vsel %vm108, %v105, 0.0
    %197 = vadd.xlane.f32.xlu0 %v196
    %v198 = vpop.xlane.xlu0 %197
    %v199 = vsel %vm108, %v106, 0.0
    %200 = vadd.xlane.f32.xlu0 %v199
    %v201 = vpop.xlane.xlu0 %200
    %v202 = vsel %vm108, %v107, 0.0
    %203 = vadd.xlane.f32.xlu0 %v202
    %v204 = vpop.xlane.xlu0 %203
    %v205 = vmul.f32 %v111, 14.285714
    %v206 = vmul.f32 %v114, 14.285714
    %v207 = vmul.f32 %v117, 14.285714
    %v208 = vmul.f32 %v120, 14.285714
    %v209 = vmul.f32 %v123, 14.285714
    %v210 = vmul.f32 %v126, 14.285714
    %v211 = vmul.f32 %v129, 14.285714
    %v212 = vmul.f32 %v132, 14.285714
    %v213 = vmul.f32 %v135, 14.285714
    %v214 = vmul.f32 %v138, 14.285714
    %v215 = vmul.f32 %v141, 14.285714
    %v216 = vmul.f32 %v144, 14.285714
    %v217 = vmul.f32 %v147, 14.285714
    %v218 = vmul.f32 %v150, 14.285714
    %v219 = vmul.f32 %v153, 14.285714
    %v220 = vmul.f32 %v156, 14.285714
    %v221 = vmul.f32 %v159, 14.285714
    %v222 = vmul.f32 %v162, 14.285714
    %v223 = vmul.f32 %v165, 14.285714
    %v224 = vmul.f32 %v168, 14.285714
    %v225 = vmul.f32 %v171, 14.285714
    %v226 = vmul.f32 %v174, 14.285714
    %v227 = vmul.f32 %v177, 14.285714
    %v228 = vmul.f32 %v180, 14.285714
    %v229 = vmul.f32 %v183, 14.285714
    %v230 = vmul.f32 %v186, 14.285714
    %v231 = vmul.f32 %v189, 14.285714
    %v232 = vmul.f32 %v192, 14.285714
    %v233 = vmul.f32 %v195, 14.285714
    %v234 = vmul.f32 %v198, 14.285714
    %v235 = vmul.f32 %v201, 14.285714
    %v236 = vmul.f32 %v204, 14.285714
    %v237 = vmul.f32 %v12, 14.285714
    %v238 = vmul.f32 %v13, 14.285714
    %v239 = vmul.f32 %v14, 14.285714
    %v240 = vmul.f32 %v15, 14.285714
    %v241 = vmul.f32 %v16, 14.285714
    %v242 = vmul.f32 %v17, 14.285714
    %v243 = vmul.f32 %v18, 14.285714
    %v244 = vmul.f32 %v19, 14.285714
    %v245 = vmul.f32 %v20, 14.285714
    %v246 = vmul.f32 %v21, 14.285714
    %v247 = vmul.f32 %v22, 14.285714
    %v248 = vmul.f32 %v23, 14.285714
    %v249 = vmul.f32 %v24, 14.285714
    %v250 = vmul.f32 %v25, 14.285714
    %v251 = vmul.f32 %v26, 14.285714
    %v252 = vmul.f32 %v27, 14.285714
    %v253 = vmul.f32 %v28, 14.285714
    %v254 = vmul.f32 %v29, 14.285714
    %v255 = vmul.f32 %v30, 14.285714
    %v256 = vmul.f32 %v31, 14.285714
    %v257 = vmul.f32 %v32, 14.285714
    %v258 = vmul.f32 %v33, 14.285714
    %v259 = vmul.f32 %v34, 14.285714
    %v260 = vmul.f32 %v35, 14.285714
    %v261 = vmul.f32 %v36, 14.285714
    %v262 = vmul.f32 %v37, 14.285714
    %v263 = vmul.f32 %v38, 14.285714
    %v264 = vmul.f32 %v39, 14.285714
    %v265 = vmul.f32 %v40, 14.285714
    %v266 = vmul.f32 %v41, 14.285714
    %v267 = vmul.f32 %v42, 14.285714
    %v268 = vmul.f32 %v43, 14.285714
    %v270 = vsel %vm108, %v237, 0
    %v273 = vsel %vm108, %v238, 0
    %v276 = vsel %vm108, %v239, 0
    %v279 = vsel %vm108, %v240, 0
    %v282 = vsel %vm108, %v241, 0
    %v285 = vsel %vm108, %v242, 0
    %v288 = vsel %vm108, %v243, 0
    %v291 = vsel %vm108, %v244, 0
    %v294 = vsel %vm108, %v245, 0
    %v297 = vsel %vm108, %v246, 0
    %v300 = vsel %vm108, %v247, 0
    %v303 = vsel %vm108, %v248, 0
    %v306 = vsel %vm108, %v249, 0
    %v309 = vsel %vm108, %v250, 0
    %v312 = vsel %vm108, %v251, 0
    %v315 = vsel %vm108, %v252, 0
    %v318 = vsel %vm108, %v44, 0
    %v321 = vsel %vm108, %v45, 0
    %v324 = vsel %vm108, %v46, 0
    %v327 = vsel %vm108, %v47, 0
    %v330 = vsel %vm108, %v48, 0
    %v333 = vsel %vm108, %v49, 0
    %v336 = vsel %vm108, %v50, 0
    %v339 = vsel %vm108, %v51, 0
    %v342 = vsel %vm108, %v52, 0
    %v345 = vsel %vm108, %v53, 0
    %v348 = vsel %vm108, %v54, 0
    %v351 = vsel %vm108, %v55, 0
    %v354 = vsel %vm108, %v56, 0
    %v357 = vsel %vm108, %v57, 0
    %v360 = vsel %vm108, %v58, 0
    %v363 = vsel %vm108, %v59, 0
    %365 = vmatprep.subr.mxu0 0.0
    %366 = vmatpush1.xpose.msra.mxu0 %v318
    %367 = vmatprep.subr.mxu0 0.0
    %368 = vmatpush1.xpose.msra.mxu0 %v321
    %369 = vmatprep.subr.mxu0 0.0
    %370 = vmatpush1.xpose.msra.mxu0 %v324
    %371 = vmatprep.subr.mxu0 0.0
    %372 = vmatpush1.xpose.msra.mxu0 %v327
    %373 = vmatprep.subr.mxu0 0.0
    %374 = vmatpush1.xpose.msra.mxu0 %v330
    %375 = vmatprep.subr.mxu0 0.0
    %376 = vmatpush1.xpose.msra.mxu0 %v333
    %377 = vmatprep.subr.mxu0 0.0
    %378 = vmatpush1.xpose.msra.mxu0 %v336
    %379 = vmatprep.subr.mxu0 0.0
    %380 = vmatpush1.xpose.msra.mxu0 %v339
    %381 = vmatprep.subr.mxu0 0.0
    %382 = vmatpush1.xpose.msra.mxu0 %v342
    %383 = vmatprep.subr.mxu0 0.0
    %384 = vmatpush1.xpose.msra.mxu0 %v345
    %385 = vmatprep.subr.mxu0 0.0
    %386 = vmatpush1.xpose.msra.mxu0 %v348
    %387 = vmatprep.subr.mxu0 0.0
    %388 = vmatpush1.xpose.msra.mxu0 %v351
    %389 = vmatprep.subr.mxu0 0.0
    %390 = vmatpush1.xpose.msra.mxu0 %v354
    %391 = vmatprep.subr.mxu0 0.0
    %392 = vmatpush1.xpose.msra.mxu0 %v357
    %393 = vmatprep.subr.mxu0 0.0
    %394 = vmatpush1.xpose.msra.mxu0 %v360
    %395 = vmatprep.subr.mxu0 0.0
    %396 = vmatpush1.xpose.msra.mxu0 %v363
    %397 = vmatprep.subr.mxu0 0.0
    %398 = vmatpush1.xpose.msra.mxu0 0.0
    %399 = vmatprep.subr.mxu0 0.0
    %400 = vmatpush1.xpose.msra.mxu0 0.0
    %401 = vmatprep.subr.mxu0 0.0
    %402 = vmatpush1.xpose.msra.mxu0 0.0
    %403 = vmatprep.subr.mxu0 0.0
    %404 = vmatpush1.xpose.msra.mxu0 0.0
    %405 = vmatprep.subr.mxu0 0.0
    %406 = vmatpush1.xpose.msra.mxu0 0.0
    %407 = vmatprep.subr.mxu0 0.0
    %408 = vmatpush1.xpose.msra.mxu0 0.0
    %409 = vmatprep.subr.mxu0 0.0
    %410 = vmatpush1.xpose.msra.mxu0 0.0
    %411 = vmatprep.subr.mxu0 0.0
    %412 = vmatpush1.xpose.msra.mxu0 0.0
    %413 = vmatprep.subr.mxu0 0.0
    %414 = vmatpush1.xpose.msra.mxu0 0.0
    %415 = vmatprep.subr.mxu0 0.0
    %416 = vmatpush1.xpose.msra.mxu0 0.0
    %417 = vmatprep.subr.mxu0 0.0
    %418 = vmatpush1.xpose.msra.mxu0 0.0
    %419 = vmatprep.subr.mxu0 0.0
    %420 = vmatpush1.xpose.msra.mxu0 0.0
    %421 = vmatprep.subr.mxu0 0.0
    %422 = vmatpush1.xpose.msra.mxu0 0.0
    %423 = vmatprep.subr.mxu0 0.0
    %424 = vmatpush1.xpose.msra.mxu0 0.0
    %425 = vmatprep.subr.mxu0 0.0
    %426 = vmatpush1.xpose.msra.mxu0 0.0
    %427 = vmatprep.subr.mxu0 0.0
    %428 = vmatpush1.xpose.msra.mxu0 0.0
    %429 = vmatprep.mubr.f32.mxu0 0.0
    %430 = vmatmul.mubr.f32.gmra.mrb[0].mxu0 %v270
    %v431 = vpop.f32.mrb[0].mxu0
    %v432 = vadd.f32 0.0, %v431
    %v433 = vpop.f32.mrb[0].mxu0
    %434 = vmatprep.mubr.f32.mxu0 0.0
    %435 = vmatmul.mubr.f32.gmra.mrb[0].mxu0 %v273
    %v436 = vpop.f32.mrb[0].mxu0
    %v437 = vadd.f32 0.0, %v436
    %v438 = vpop.f32.mrb[0].mxu0
    %439 = vmatprep.mubr.f32.mxu0 0.0
    %440 = vmatmul.mubr.f32.gmra.mrb[0].mxu0 %v276
    %v441 = vpop.f32.mrb[0].mxu0
    %v442 = vadd.f32 0.0, %v441
    %v443 = vpop.f32.mrb[0].mxu0
    %444 = vmatprep.mubr.f32.mxu0 0.0
    %445 = vmatmul.mubr.f32.gmra.mrb[0].mxu0 %v279
    %v446 = vpop.f32.mrb[0].mxu0
    %v447 = vadd.f32 0.0, %v446
    %v448 = vpop.f32.mrb[0].mxu0
    %449 = vmatprep.mubr.f32.mxu0 0.0
    %450 = vmatmul.mubr.f32.gmra.mrb[0].mxu0 %v282
    %v451 = vpop.f32.mrb[0].mxu0
    %v452 = vadd.f32 0.0, %v451
    %v453 = vpop.f32.mrb[0].mxu0
    %454 = vmatprep.mubr.f32.mxu0 0.0
    %455 = vmatmul.mubr.f32.gmra.mrb[0].mxu0 %v285
    %v456 = vpop.f32.mrb[0].mxu0
    %v457 = vadd.f32 0.0, %v456
    %v458 = vpop.f32.mrb[0].mxu0
    %459 = vmatprep.mubr.f32.mxu0 0.0
    %460 = vmatmul.mubr.f32.gmra.mrb[0].mxu0 %v288
    %v461 = vpop.f32.mrb[0].mxu0
    %v462 = vadd.f32 0.0, %v461
    %v463 = vpop.f32.mrb[0].mxu0
    %464 = vmatprep.mubr.f32.mxu0 0.0
    %465 = vmatmul.mubr.f32.gmra.mrb[0].mxu0 %v291
    %v466 = vpop.f32.mrb[0].mxu0
    %v467 = vadd.f32 0.0, %v466
    %v468 = vpop.f32.mrb[0].mxu0
    %469 = vmatprep.mubr.f32.mxu0 0.0
    %470 = vmatmul.mubr.f32.gmra.mrb[0].mxu0 %v294
    %v471 = vpop.f32.mrb[0].mxu0
    %v472 = vadd.f32 0.0, %v471
    %v473 = vpop.f32.mrb[0].mxu0
    %474 = vmatprep.mubr.f32.mxu0 0.0
    %475 = vmatmul.mubr.f32.gmra.mrb[0].mxu0 %v297
    %v476 = vpop.f32.mrb[0].mxu0
    %v477 = vadd.f32 0.0, %v476
    %v478 = vpop.f32.mrb[0].mxu0
    %479 = vmatprep.mubr.f32.mxu0 0.0
    %480 = vmatmul.mubr.f32.gmra.mrb[0].mxu0 %v300
    %v481 = vpop.f32.mrb[0].mxu0
    %v482 = vadd.f32 0.0, %v481
    %v483 = vpop.f32.mrb[0].mxu0
    %484 = vmatprep.mubr.f32.mxu0 0.0
    %485 = vmatmul.mubr.f32.gmra.mrb[0].mxu0 %v303
    %v486 = vpop.f32.mrb[0].mxu0
    %v487 = vadd.f32 0.0, %v486
    %v488 = vpop.f32.mrb[0].mxu0
    %489 = vmatprep.mubr.f32.mxu0 0.0
    %490 = vmatmul.mubr.f32.gmra.mrb[0].mxu0 %v306
    %v491 = vpop.f32.mrb[0].mxu0
    %v492 = vadd.f32 0.0, %v491
    %v493 = vpop.f32.mrb[0].mxu0
    %494 = vmatprep.mubr.f32.mxu0 0.0
    %495 = vmatmul.mubr.f32.gmra.mrb[0].mxu0 %v309
    %v496 = vpop.f32.mrb[0].mxu0
    %v497 = vadd.f32 0.0, %v496
    %v498 = vpop.f32.mrb[0].mxu0
    %499 = vmatprep.mubr.f32.mxu0 0.0
    %500 = vmatmul.mubr.f32.gmra.mrb[0].mxu0 %v312
    %v501 = vpop.f32.mrb[0].mxu0
    %v502 = vadd.f32 0.0, %v501
    %v503 = vpop.f32.mrb[0].mxu0
    %504 = vmatprep.mubr.f32.mxu0 0.0
    %505 = vmatmul.mubr.f32.gmra.mrb[0].mxu0 %v315
    %v506 = vpop.f32.mrb[0].mxu0
    %v507 = vadd.f32 0.0, %v506
    %v508 = vpop.f32.mrb[0].mxu0
    %509 = vdwg.mxu0
    %v511 = vsel %vm108, %v253, 0
    %v514 = vsel %vm108, %v254, 0
    %v517 = vsel %vm108, %v255, 0
    %v520 = vsel %vm108, %v256, 0
    %v523 = vsel %vm108, %v257, 0
    %v526 = vsel %vm108, %v258, 0
    %v529 = vsel %vm108, %v259, 0
    %v532 = vsel %vm108, %v260, 0
    %v535 = vsel %vm108, %v261, 0
    %v538 = vsel %vm108, %v262, 0
    %v541 = vsel %vm108, %v263, 0
    %v544 = vsel %vm108, %v264, 0
    %v547 = vsel %vm108, %v265, 0
    %v550 = vsel %vm108, %v266, 0
    %v553 = vsel %vm108, %v267, 0
    %v556 = vsel %vm108, %v268, 0
    %v559 = vsel %vm108, %v60, 0
    %v562 = vsel %vm108, %v61, 0
    %v565 = vsel %vm108, %v62, 0
    %v568 = vsel %vm108, %v63, 0
    %v571 = vsel %vm108, %v64, 0
    %v574 = vsel %vm108, %v65, 0
    %v577 = vsel %vm108, %v66, 0
    %v580 = vsel %vm108, %v67, 0
    %v583 = vsel %vm108, %v68, 0
    %v586 = vsel %vm108, %v69, 0
    %v589 = vsel %vm108, %v70, 0
    %v592 = vsel %vm108, %v71, 0
    %v595 = vsel %vm108, %v72, 0
    %v598 = vsel %vm108, %v73, 0
    %v601 = vsel %vm108, %v74, 0
    %v604 = vsel %vm108, %v75, 0
    %606 = vmatprep.subr.mxu0 0.0
    %607 = vmatpush1.xpose.msra.mxu0 %v559
    %608 = vmatprep.subr.mxu0 0.0
    %609 = vmatpush1.xpose.msra.mxu0 %v562
    %610 = vmatprep.subr.mxu0 0.0
    %611 = vmatpush1.xpose.msra.mxu0 %v565
    %612 = vmatprep.subr.mxu0 0.0
    %613 = vmatpush1.xpose.msra.mxu0 %v568
    %614 = vmatprep.subr.mxu0 0.0
    %615 = vmatpush1.xpose.msra.mxu0 %v571
    %616 = vmatprep.subr.mxu0 0.0
    %617 = vmatpush1.xpose.msra.mxu0 %v574
    %618 = vmatprep.subr.mxu0 0.0
    %619 = vmatpush1.xpose.msra.mxu0 %v577
    %620 = vmatprep.subr.mxu0 0.0
    %621 = vmatpush1.xpose.msra.mxu0 %v580
    %622 = vmatprep.subr.mxu0 0.0
    %623 = vmatpush1.xpose.msra.mxu0 %v583
    %624 = vmatprep.subr.mxu0 0.0
    %625 = vmatpush1.xpose.msra.mxu0 %v586
    %626 = vmatprep.subr.mxu0 0.0
    %627 = vmatpush1.xpose.msra.mxu0 %v589
    %628 = vmatprep.subr.mxu0 0.0
    %629 = vmatpush1.xpose.msra.mxu0 %v592
    %630 = vmatprep.subr.mxu0 0.0
    %631 = vmatpush1.xpose.msra.mxu0 %v595
    %632 = vmatprep.subr.mxu0 0.0
    %633 = vmatpush1.xpose.msra.mxu0 %v598
    %634 = vmatprep.subr.mxu0 0.0
    %635 = vmatpush1.xpose.msra.mxu0 %v601
    %636 = vmatprep.subr.mxu0 0.0
    %637 = vmatpush1.xpose.msra.mxu0 %v604
    %638 = vmatprep.subr.mxu0 0.0
    %639 = vmatpush1.xpose.msra.mxu0 0.0
    %640 = vmatprep.subr.mxu0 0.0
    %641 = vmatpush1.xpose.msra.mxu0 0.0
    %642 = vmatprep.subr.mxu0 0.0
    %643 = vmatpush1.xpose.msra.mxu0 0.0
    %644 = vmatprep.subr.mxu0 0.0
    %645 = vmatpush1.xpose.msra.mxu0 0.0
    %646 = vmatprep.subr.mxu0 0.0
    %647 = vmatpush1.xpose.msra.mxu0 0.0
    %648 = vmatprep.subr.mxu0 0.0
    %649 = vmatpush1.xpose.msra.mxu0 0.0
    %650 = vmatprep.subr.mxu0 0.0
    %651 = vmatpush1.xpose.msra.mxu0 0.0
    %652 = vmatprep.subr.mxu0 0.0
    %653 = vmatpush1.xpose.msra.mxu0 0.0
    %654 = vmatprep.subr.mxu0 0.0
    %655 = vmatpush1.xpose.msra.mxu0 0.0
    %656 = vmatprep.subr.mxu0 0.0
    %657 = vmatpush1.xpose.msra.mxu0 0.0
    %658 = vmatprep.subr.mxu0 0.0
    %659 = vmatpush1.xpose.msra.mxu0 0.0
    %660 = vmatprep.subr.mxu0 0.0
    %661 = vmatpush1.xpose.msra.mxu0 0.0
    %662 = vmatprep.subr.mxu0 0.0
    %663 = vmatpush1.xpose.msra.mxu0 0.0
    %664 = vmatprep.subr.mxu0 0.0
    %665 = vmatpush1.xpose.msra.mxu0 0.0
    %666 = vmatprep.subr.mxu0 0.0
    %667 = vmatpush1.xpose.msra.mxu0 0.0
    %668 = vmatprep.subr.mxu0 0.0
    %669 = vmatpush1.xpose.msra.mxu0 0.0
    %670 = vmatprep.mubr.f32.mxu0 0.0
    %671 = vmatmul.mubr.f32.gmra.mrb[0].mxu0 %v511
    %v672 = vpop.f32.mrb[0].mxu0
    %v673 = vadd.f32 0.0, %v672
    %v674 = vpop.f32.mrb[0].mxu0
    %675 = vmatprep.mubr.f32.mxu0 0.0
    %676 = vmatmul.mubr.f32.gmra.mrb[0].mxu0 %v514
    %v677 = vpop.f32.mrb[0].mxu0
    %v678 = vadd.f32 0.0, %v677
    %v679 = vpop.f32.mrb[0].mxu0
    %680 = vmatprep.mubr.f32.mxu0 0.0
    %681 = vmatmul.mubr.f32.gmra.mrb[0].mxu0 %v517
    %v682 = vpop.f32.mrb[0].mxu0
    %v683 = vadd.f32 0.0, %v682
    %v684 = vpop.f32.mrb[0].mxu0
    %685 = vmatprep.mubr.f32.mxu0 0.0
    %686 = vmatmul.mubr.f32.gmra.mrb[0].mxu0 %v520
    %v687 = vpop.f32.mrb[0].mxu0
    %v688 = vadd.f32 0.0, %v687
    %v689 = vpop.f32.mrb[0].mxu0
    %690 = vmatprep.mubr.f32.mxu0 0.0
    %691 = vmatmul.mubr.f32.gmra.mrb[0].mxu0 %v523
    %v692 = vpop.f32.mrb[0].mxu0
    %v693 = vadd.f32 0.0, %v692
    %v694 = vpop.f32.mrb[0].mxu0
    %695 = vmatprep.mubr.f32.mxu0 0.0
    %696 = vmatmul.mubr.f32.gmra.mrb[0].mxu0 %v526
    %v697 = vpop.f32.mrb[0].mxu0
    %v698 = vadd.f32 0.0, %v697
    %v699 = vpop.f32.mrb[0].mxu0
    %700 = vmatprep.mubr.f32.mxu0 0.0
    %701 = vmatmul.mubr.f32.gmra.mrb[0].mxu0 %v529
    %v702 = vpop.f32.mrb[0].mxu0
    %v703 = vadd.f32 0.0, %v702
    %v704 = vpop.f32.mrb[0].mxu0
    %705 = vmatprep.mubr.f32.mxu0 0.0
    %706 = vmatmul.mubr.f32.gmra.mrb[0].mxu0 %v532
    %v707 = vpop.f32.mrb[0].mxu0
    %v708 = vadd.f32 0.0, %v707
    %v709 = vpop.f32.mrb[0].mxu0
    %710 = vmatprep.mubr.f32.mxu0 0.0
    %711 = vmatmul.mubr.f32.gmra.mrb[0].mxu0 %v535
    %v712 = vpop.f32.mrb[0].mxu0
    %v713 = vadd.f32 0.0, %v712
    %v714 = vpop.f32.mrb[0].mxu0
    %715 = vmatprep.mubr.f32.mxu0 0.0
    %716 = vmatmul.mubr.f32.gmra.mrb[0].mxu0 %v538
    %v717 = vpop.f32.mrb[0].mxu0
    %v718 = vadd.f32 0.0, %v717
    %v719 = vpop.f32.mrb[0].mxu0
    %720 = vmatprep.mubr.f32.mxu0 0.0
    %721 = vmatmul.mubr.f32.gmra.mrb[0].mxu0 %v541
    %v722 = vpop.f32.mrb[0].mxu0
    %v723 = vadd.f32 0.0, %v722
    %v724 = vpop.f32.mrb[0].mxu0
    %725 = vmatprep.mubr.f32.mxu0 0.0
    %726 = vmatmul.mubr.f32.gmra.mrb[0].mxu0 %v544
    %v727 = vpop.f32.mrb[0].mxu0
    %v728 = vadd.f32 0.0, %v727
    %v729 = vpop.f32.mrb[0].mxu0
    %730 = vmatprep.mubr.f32.mxu0 0.0
    %731 = vmatmul.mubr.f32.gmra.mrb[0].mxu0 %v547
    %v732 = vpop.f32.mrb[0].mxu0
    %v733 = vadd.f32 0.0, %v732
    %v734 = vpop.f32.mrb[0].mxu0
    %735 = vmatprep.mubr.f32.mxu0 0.0
    %736 = vmatmul.mubr.f32.gmra.mrb[0].mxu0 %v550
    %v737 = vpop.f32.mrb[0].mxu0
    %v738 = vadd.f32 0.0, %v737
    %v739 = vpop.f32.mrb[0].mxu0
    %740 = vmatprep.mubr.f32.mxu0 0.0
    %741 = vmatmul.mubr.f32.gmra.mrb[0].mxu0 %v553
    %v742 = vpop.f32.mrb[0].mxu0
    %v743 = vadd.f32 0.0, %v742
    %v744 = vpop.f32.mrb[0].mxu0
    %745 = vmatprep.mubr.f32.mxu0 0.0
    %746 = vmatmul.mubr.f32.gmra.mrb[0].mxu0 %v556
    %v747 = vpop.f32.mrb[0].mxu0
    %v748 = vadd.f32 0.0, %v747
    %v749 = vpop.f32.mrb[0].mxu0
    %750 = vdwg.mxu0
    %751 = vmax.xlane.f32.xlu0 %v432
    %v752 = vpop.xlane.xlu0 %751
    %753 = vmax.xlane.f32.xlu0 %v437
    %v754 = vpop.xlane.xlu0 %753
    %755 = vmax.xlane.f32.xlu0 %v442
    %v756 = vpop.xlane.xlu0 %755
    %757 = vmax.xlane.f32.xlu0 %v447
    %v758 = vpop.xlane.xlu0 %757
    %759 = vmax.xlane.f32.xlu0 %v452
    %v760 = vpop.xlane.xlu0 %759
    %761 = vmax.xlane.f32.xlu0 %v457
    %v762 = vpop.xlane.xlu0 %761
    %763 = vmax.xlane.f32.xlu0 %v462
    %v764 = vpop.xlane.xlu0 %763
    %765 = vmax.xlane.f32.xlu0 %v467
    %v766 = vpop.xlane.xlu0 %765
    %767 = vmax.xlane.f32.xlu0 %v472
    %v768 = vpop.xlane.xlu0 %767
    %769 = vmax.xlane.f32.xlu0 %v477
    %v770 = vpop.xlane.xlu0 %769
    %771 = vmax.xlane.f32.xlu0 %v482
    %v772 = vpop.xlane.xlu0 %771
    %773 = vmax.xlane.f32.xlu0 %v487
    %v774 = vpop.xlane.xlu0 %773
    %775 = vmax.xlane.f32.xlu0 %v492
    %v776 = vpop.xlane.xlu0 %775
    %777 = vmax.xlane.f32.xlu0 %v497
    %v778 = vpop.xlane.xlu0 %777
    %779 = vmax.xlane.f32.xlu0 %v502
    %v780 = vpop.xlane.xlu0 %779
    %781 = vmax.xlane.f32.xlu0 %v507
    %v782 = vpop.xlane.xlu0 %781
    %783 = vmax.xlane.f32.xlu0 %v673
    %v784 = vpop.xlane.xlu0 %783
    %785 = vmax.xlane.f32.xlu0 %v678
    %v786 = vpop.xlane.xlu0 %785
    %787 = vmax.xlane.f32.xlu0 %v683
    %v788 = vpop.xlane.xlu0 %787
    %789 = vmax.xlane.f32.xlu0 %v688
    %v790 = vpop.xlane.xlu0 %789
    %791 = vmax.xlane.f32.xlu0 %v693
    %v792 = vpop.xlane.xlu0 %791
    %793 = vmax.xlane.f32.xlu0 %v698
    %v794 = vpop.xlane.xlu0 %793
    %795 = vmax.xlane.f32.xlu0 %v703
    %v796 = vpop.xlane.xlu0 %795
    %797 = vmax.xlane.f32.xlu0 %v708
    %v798 = vpop.xlane.xlu0 %797
    %799 = vmax.xlane.f32.xlu0 %v713
    %v800 = vpop.xlane.xlu0 %799
    %801 = vmax.xlane.f32.xlu0 %v718
    %v802 = vpop.xlane.xlu0 %801
    %803 = vmax.xlane.f32.xlu0 %v723
    %v804 = vpop.xlane.xlu0 %803
    %805 = vmax.xlane.f32.xlu0 %v728
    %v806 = vpop.xlane.xlu0 %805
    %807 = vmax.xlane.f32.xlu0 %v733
    %v808 = vpop.xlane.xlu0 %807
    %809 = vmax.xlane.f32.xlu0 %v738
    %v810 = vpop.xlane.xlu0 %809
    %811 = vmax.xlane.f32.xlu0 %v743
    %v812 = vpop.xlane.xlu0 %811
    %813 = vmax.xlane.f32.xlu0 %v748
    %v814 = vpop.xlane.xlu0 %813
    %v815 = vmax.f32 %v205, %v752
    %v816 = vmax.f32 %v206, %v754
    %v817 = vmax.f32 %v207, %v756
    %v818 = vmax.f32 %v208, %v758
    %v819 = vmax.f32 %v209, %v760
    %v820 = vmax.f32 %v210, %v762
    %v821 = vmax.f32 %v211, %v764
    %v822 = vmax.f32 %v212, %v766
    %v823 = vmax.f32 %v213, %v768
    %v824 = vmax.f32 %v214, %v770
    %v825 = vmax.f32 %v215, %v772
    %v826 = vmax.f32 %v216, %v774
    %v827 = vmax.f32 %v217, %v776
    %v828 = vmax.f32 %v218, %v778
    %v829 = vmax.f32 %v219, %v780
    %v830 = vmax.f32 %v220, %v782
    %v831 = vmax.f32 %v221, %v784
    %v832 = vmax.f32 %v222, %v786
    %v833 = vmax.f32 %v223, %v788
    %v834 = vmax.f32 %v224, %v790
    %v835 = vmax.f32 %v225, %v792
    %v836 = vmax.f32 %v226, %v794
    %v837 = vmax.f32 %v227, %v796
    %v838 = vmax.f32 %v228, %v798
    %v839 = vmax.f32 %v229, %v800
    %v840 = vmax.f32 %v230, %v802
    %v841 = vmax.f32 %v231, %v804
    %v842 = vmax.f32 %v232, %v806
    %v843 = vmax.f32 %v233, %v808
    %v844 = vmax.f32 %v234, %v810
    %v845 = vmax.f32 %v235, %v812
    %v846 = vmax.f32 %v236, %v814
    %v847 = vsub.f32 %v432, %v815
    %v848 = vsub.f32 %v437, %v816
    %v849 = vsub.f32 %v442, %v817
    %v850 = vsub.f32 %v447, %v818
    %v851 = vsub.f32 %v452, %v819
    %v852 = vsub.f32 %v457, %v820
    %v853 = vsub.f32 %v462, %v821
    %v854 = vsub.f32 %v467, %v822
    %v855 = vsub.f32 %v472, %v823
    %v856 = vsub.f32 %v477, %v824
    %v857 = vsub.f32 %v482, %v825
    %v858 = vsub.f32 %v487, %v826
    %v859 = vsub.f32 %v492, %v827
    %v860 = vsub.f32 %v497, %v828
    %v861 = vsub.f32 %v502, %v829
    %v862 = vsub.f32 %v507, %v830
    %v863 = vsub.f32 %v673, %v831
    %v864 = vsub.f32 %v678, %v832
    %v865 = vsub.f32 %v683, %v833
    %v866 = vsub.f32 %v688, %v834
    %v867 = vsub.f32 %v693, %v835
    %v868 = vsub.f32 %v698, %v836
    %v869 = vsub.f32 %v703, %v837
    %v870 = vsub.f32 %v708, %v838
    %v871 = vsub.f32 %v713, %v839
    %v872 = vsub.f32 %v718, %v840
    %v873 = vsub.f32 %v723, %v841
    %v874 = vsub.f32 %v728, %v842
    %v875 = vsub.f32 %v733, %v843
    %v876 = vsub.f32 %v738, %v844
    %v877 = vsub.f32 %v743, %v845
    %v878 = vsub.f32 %v748, %v846
    %v879 = vmul.f32 %v847, 1.442695
    %v880 = vpow.pop %v879
    %v881 = vmul.f32 %v848, 1.442695
    %v882 = vpow.pop %v881
    %v883 = vmul.f32 %v849, 1.442695
    %v884 = vpow.pop %v883
    %v885 = vmul.f32 %v850, 1.442695
    %v886 = vpow.pop %v885
    %v887 = vmul.f32 %v851, 1.442695
    %v888 = vpow.pop %v887
    %v889 = vmul.f32 %v852, 1.442695
    %v890 = vpow.pop %v889
    %v891 = vmul.f32 %v853, 1.442695
    %v892 = vpow.pop %v891
    %v893 = vmul.f32 %v854, 1.442695
    %v894 = vpow.pop %v893
    %v895 = vmul.f32 %v855, 1.442695
    %v896 = vpow.pop %v895
    %v897 = vmul.f32 %v856, 1.442695
    %v898 = vpow.pop %v897
    %v899 = vmul.f32 %v857, 1.442695
    %v900 = vpow.pop %v899
    %v901 = vmul.f32 %v858, 1.442695
    %v902 = vpow.pop %v901
    %v903 = vmul.f32 %v859, 1.442695
    %v904 = vpow.pop %v903
    %v905 = vmul.f32 %v860, 1.442695
    %v906 = vpow.pop %v905
    %v907 = vmul.f32 %v861, 1.442695
    %v908 = vpow.pop %v907
    %v909 = vmul.f32 %v862, 1.442695
    %v910 = vpow.pop %v909
    %v911 = vmul.f32 %v863, 1.442695
    %v912 = vpow.pop %v911
    %v913 = vmul.f32 %v864, 1.442695
    %v914 = vpow.pop %v913
    %v915 = vmul.f32 %v865, 1.442695
    %v916 = vpow.pop %v915
    %v917 = vmul.f32 %v866, 1.442695
    %v918 = vpow.pop %v917
    %v919 = vmul.f32 %v867, 1.442695
    %v920 = vpow.pop %v919
    %v921 = vmul.f32 %v868, 1.442695
    %v922 = vpow.pop %v921
    %v923 = vmul.f32 %v869, 1.442695
    %v924 = vpow.pop %v923
    %v925 = vmul.f32 %v870, 1.442695
    %v926 = vpow.pop %v925
    %v927 = vmul.f32 %v871, 1.442695
    %v928 = vpow.pop %v927
    %v929 = vmul.f32 %v872, 1.442695
    %v930 = vpow.pop %v929
    %v931 = vmul.f32 %v873, 1.442695
    %v932 = vpow.pop %v931
    %v933 = vmul.f32 %v874, 1.442695
    %v934 = vpow.pop %v933
    %v935 = vmul.f32 %v875, 1.442695
    %v936 = vpow.pop %v935
    %v937 = vmul.f32 %v876, 1.442695
    %v938 = vpow.pop %v937
    %v939 = vmul.f32 %v877, 1.442695
    %v940 = vpow.pop %v939
    %v941 = vmul.f32 %v878, 1.442695
    %v942 = vpow.pop %v941
    %943 = vadd.xlane.f32.xlu0 %v880
    %v944 = vpop.xlane.xlu0 %943
    %945 = vadd.xlane.f32.xlu0 %v882
    %v946 = vpop.xlane.xlu0 %945
    %947 = vadd.xlane.f32.xlu0 %v884
    %v948 = vpop.xlane.xlu0 %947
    %949 = vadd.xlane.f32.xlu0 %v886
    %v950 = vpop.xlane.xlu0 %949
    %951 = vadd.xlane.f32.xlu0 %v888
    %v952 = vpop.xlane.xlu0 %951
    %953 = vadd.xlane.f32.xlu0 %v890
    %v954 = vpop.xlane.xlu0 %953
    %955 = vadd.xlane.f32.xlu0 %v892
    %v956 = vpop.xlane.xlu0 %955
    %957 = vadd.xlane.f32.xlu0 %v894
    %v958 = vpop.xlane.xlu0 %957
    %959 = vadd.xlane.f32.xlu0 %v896
    %v960 = vpop.xlane.xlu0 %959
    %961 = vadd.xlane.f32.xlu0 %v898
    %v962 = vpop.xlane.xlu0 %961
    %963 = vadd.xlane.f32.xlu0 %v900
    %v964 = vpop.xlane.xlu0 %963
    %965 = vadd.xlane.f32.xlu0 %v902
    %v966 = vpop.xlane.xlu0 %965
    %967 = vadd.xlane.f32.xlu0 %v904
    %v968 = vpop.xlane.xlu0 %967
    %969 = vadd.xlane.f32.xlu0 %v906
    %v970 = vpop.xlane.xlu0 %969
    %971 = vadd.xlane.f32.xlu0 %v908
    %v972 = vpop.xlane.xlu0 %971
    %973 = vadd.xlane.f32.xlu0 %v910
    %v974 = vpop.xlane.xlu0 %973
    %975 = vadd.xlane.f32.xlu0 %v912
    %v976 = vpop.xlane.xlu0 %975
    %977 = vadd.xlane.f32.xlu0 %v914
    %v978 = vpop.xlane.xlu0 %977
    %979 = vadd.xlane.f32.xlu0 %v916
    %v980 = vpop.xlane.xlu0 %979
    %981 = vadd.xlane.f32.xlu0 %v918
    %v982 = vpop.xlane.xlu0 %981
    %983 = vadd.xlane.f32.xlu0 %v920
    %v984 = vpop.xlane.xlu0 %983
    %985 = vadd.xlane.f32.xlu0 %v922
    %v986 = vpop.xlane.xlu0 %985
    %987 = vadd.xlane.f32.xlu0 %v924
    %v988 = vpop.xlane.xlu0 %987
    %989 = vadd.xlane.f32.xlu0 %v926
    %v990 = vpop.xlane.xlu0 %989
    %991 = vadd.xlane.f32.xlu0 %v928
    %v992 = vpop.xlane.xlu0 %991
    %993 = vadd.xlane.f32.xlu0 %v930
    %v994 = vpop.xlane.xlu0 %993
    %995 = vadd.xlane.f32.xlu0 %v932
    %v996 = vpop.xlane.xlu0 %995
    %997 = vadd.xlane.f32.xlu0 %v934
    %v998 = vpop.xlane.xlu0 %997
    %999 = vadd.xlane.f32.xlu0 %v936
    %v1000 = vpop.xlane.xlu0 %999
    %1001 = vadd.xlane.f32.xlu0 %v938
    %v1002 = vpop.xlane.xlu0 %1001
    %1003 = vadd.xlane.f32.xlu0 %v940
    %v1004 = vpop.xlane.xlu0 %1003
    %1005 = vadd.xlane.f32.xlu0 %v942
    %v1006 = vpop.xlane.xlu0 %1005
    %v1007 = vsub.f32 -142.85715, %v815
    %v1008 = vsub.f32 -142.85715, %v816
    %v1009 = vsub.f32 -142.85715, %v817
    %v1010 = vsub.f32 -142.85715, %v818
    %v1011 = vsub.f32 -142.85715, %v819
    %v1012 = vsub.f32 -142.85715, %v820
    %v1013 = vsub.f32 -142.85715, %v821
    %v1014 = vsub.f32 -142.85715, %v822
    %v1015 = vsub.f32 -142.85715, %v823
    %v1016 = vsub.f32 -142.85715, %v824
    %v1017 = vsub.f32 -142.85715, %v825
    %v1018 = vsub.f32 -142.85715, %v826
    %v1019 = vsub.f32 -142.85715, %v827
    %v1020 = vsub.f32 -142.85715, %v828
    %v1021 = vsub.f32 -142.85715, %v829
    %v1022 = vsub.f32 -142.85715, %v830
    %v1023 = vsub.f32 -142.85715, %v831
    %v1024 = vsub.f32 -142.85715, %v832
    %v1025 = vsub.f32 -142.85715, %v833
    %v1026 = vsub.f32 -142.85715, %v834
    %v1027 = vsub.f32 -142.85715, %v835
    %v1028 = vsub.f32 -142.85715, %v836
    %v1029 = vsub.f32 -142.85715, %v837
    %v1030 = vsub.f32 -142.85715, %v838
    %v1031 = vsub.f32 -142.85715, %v839
    %v1032 = vsub.f32 -142.85715, %v840
    %v1033 = vsub.f32 -142.85715, %v841
    %v1034 = vsub.f32 -142.85715, %v842
    %v1035 = vsub.f32 -142.85715, %v843
    %v1036 = vsub.f32 -142.85715, %v844
    %v1037 = vsub.f32 -142.85715, %v845
    %v1038 = vsub.f32 -142.85715, %v846
    %v1039 = vmul.f32 %v1007, 1.442695
    %v1040 = vpow.pop %v1039
    %v1041 = vmul.f32 %v1008, 1.442695
    %v1042 = vpow.pop %v1041
    %v1043 = vmul.f32 %v1009, 1.442695
    %v1044 = vpow.pop %v1043
    %v1045 = vmul.f32 %v1010, 1.442695
    %v1046 = vpow.pop %v1045
    %v1047 = vmul.f32 %v1011, 1.442695
    %v1048 = vpow.pop %v1047
    %v1049 = vmul.f32 %v1012, 1.442695
    %v1050 = vpow.pop %v1049
    %v1051 = vmul.f32 %v1013, 1.442695
    %v1052 = vpow.pop %v1051
    %v1053 = vmul.f32 %v1014, 1.442695
    %v1054 = vpow.pop %v1053
    %v1055 = vmul.f32 %v1015, 1.442695
    %v1056 = vpow.pop %v1055
    %v1057 = vmul.f32 %v1016, 1.442695
    %v1058 = vpow.pop %v1057
    %v1059 = vmul.f32 %v1017, 1.442695
    %v1060 = vpow.pop %v1059
    %v1061 = vmul.f32 %v1018, 1.442695
    %v1062 = vpow.pop %v1061
    %v1063 = vmul.f32 %v1019, 1.442695
    %v1064 = vpow.pop %v1063
    %v1065 = vmul.f32 %v1020, 1.442695
    %v1066 = vpow.pop %v1065
    %v1067 = vmul.f32 %v1021, 1.442695
    %v1068 = vpow.pop %v1067
    %v1069 = vmul.f32 %v1022, 1.442695
    %v1070 = vpow.pop %v1069
    %v1071 = vmul.f32 %v1023, 1.442695
    %v1072 = vpow.pop %v1071
    %v1073 = vmul.f32 %v1024, 1.442695
    %v1074 = vpow.pop %v1073
    %v1075 = vmul.f32 %v1025, 1.442695
    %v1076 = vpow.pop %v1075
    %v1077 = vmul.f32 %v1026, 1.442695
    %v1078 = vpow.pop %v1077
    %v1079 = vmul.f32 %v1027, 1.442695
    %v1080 = vpow.pop %v1079
    %v1081 = vmul.f32 %v1028, 1.442695
    %v1082 = vpow.pop %v1081
    %v1083 = vmul.f32 %v1029, 1.442695
    %v1084 = vpow.pop %v1083
    %v1085 = vmul.f32 %v1030, 1.442695
    %v1086 = vpow.pop %v1085
    %v1087 = vmul.f32 %v1031, 1.442695
    %v1088 = vpow.pop %v1087
    %v1089 = vmul.f32 %v1032, 1.442695
    %v1090 = vpow.pop %v1089
    %v1091 = vmul.f32 %v1033, 1.442695
    %v1092 = vpow.pop %v1091
    %v1093 = vmul.f32 %v1034, 1.442695
    %v1094 = vpow.pop %v1093
    %v1095 = vmul.f32 %v1035, 1.442695
    %v1096 = vpow.pop %v1095
    %v1097 = vmul.f32 %v1036, 1.442695
    %v1098 = vpow.pop %v1097
    %v1099 = vmul.f32 %v1037, 1.442695
    %v1100 = vpow.pop %v1099
    %v1101 = vmul.f32 %v1038, 1.442695
    %v1102 = vpow.pop %v1101
    %v1103 = vadd.f32 %v944, %v1040
    %v1104 = vadd.f32 %v946, %v1042
    %v1105 = vadd.f32 %v948, %v1044
    %v1106 = vadd.f32 %v950, %v1046
    %v1107 = vadd.f32 %v952, %v1048
    %v1108 = vadd.f32 %v954, %v1050
    %v1109 = vadd.f32 %v956, %v1052
    %v1110 = vadd.f32 %v958, %v1054
    %v1111 = vadd.f32 %v960, %v1056
    %v1112 = vadd.f32 %v962, %v1058
    %v1113 = vadd.f32 %v964, %v1060
    %v1114 = vadd.f32 %v966, %v1062
    %v1115 = vadd.f32 %v968, %v1064
    %v1116 = vadd.f32 %v970, %v1066
    %v1117 = vadd.f32 %v972, %v1068
    %v1118 = vadd.f32 %v974, %v1070
    %v1119 = vadd.f32 %v976, %v1072
    %v1120 = vadd.f32 %v978, %v1074
    %v1121 = vadd.f32 %v980, %v1076
    %v1122 = vadd.f32 %v982, %v1078
    %v1123 = vadd.f32 %v984, %v1080
    %v1124 = vadd.f32 %v986, %v1082
    %v1125 = vadd.f32 %v988, %v1084
    %v1126 = vadd.f32 %v990, %v1086
    %v1127 = vadd.f32 %v992, %v1088
    %v1128 = vadd.f32 %v994, %v1090
    %v1129 = vadd.f32 %v996, %v1092
    %v1130 = vadd.f32 %v998, %v1094
    %v1131 = vadd.f32 %v1000, %v1096
    %v1132 = vadd.f32 %v1002, %v1098
    %v1133 = vadd.f32 %v1004, %v1100
    %v1134 = vadd.f32 %v1006, %v1102
    %v1135 = vsub.f32 0.0, %v205
    %v1136 = vsub.f32 0.0, %v206
    %v1137 = vsub.f32 0.0, %v207
    %v1138 = vsub.f32 0.0, %v208
    %v1139 = vsub.f32 0.0, %v209
    %v1140 = vsub.f32 0.0, %v210
    %v1141 = vsub.f32 0.0, %v211
    %v1142 = vsub.f32 0.0, %v212
    %v1143 = vsub.f32 0.0, %v213
    %v1144 = vsub.f32 0.0, %v214
    %v1145 = vsub.f32 0.0, %v215
    %v1146 = vsub.f32 0.0, %v216
    %v1147 = vsub.f32 0.0, %v217
    %v1148 = vsub.f32 0.0, %v218
    %v1149 = vsub.f32 0.0, %v219
    %v1150 = vsub.f32 0.0, %v220
    %v1151 = vsub.f32 0.0, %v221
    %v1152 = vsub.f32 0.0, %v222
    %v1153 = vsub.f32 0.0, %v223
    %v1154 = vsub.f32 0.0, %v224
    %v1155 = vsub.f32 0.0, %v225
    %v1156 = vsub.f32 0.0, %v226
    %v1157 = vsub.f32 0.0, %v227
    %v1158 = vsub.f32 0.0, %v228
    %v1159 = vsub.f32 0.0, %v229
    %v1160 = vsub.f32 0.0, %v230
    %v1161 = vsub.f32 0.0, %v231
    %v1162 = vsub.f32 0.0, %v232
    %v1163 = vsub.f32 0.0, %v233
    %v1164 = vsub.f32 0.0, %v234
    %v1165 = vsub.f32 0.0, %v235
    %v1166 = vsub.f32 0.0, %v236
    %v1167 = vadd.f32 %v1135, %v815
    %v1168 = vadd.f32 %v1136, %v816
    %v1169 = vadd.f32 %v1137, %v817
    %v1170 = vadd.f32 %v1138, %v818
    %v1171 = vadd.f32 %v1139, %v819
    %v1172 = vadd.f32 %v1140, %v820
    %v1173 = vadd.f32 %v1141, %v821
    %v1174 = vadd.f32 %v1142, %v822
    %v1175 = vadd.f32 %v1143, %v823
    %v1176 = vadd.f32 %v1144, %v824
    %v1177 = vadd.f32 %v1145, %v825
    %v1178 = vadd.f32 %v1146, %v826
    %v1179 = vadd.f32 %v1147, %v827
    %v1180 = vadd.f32 %v1148, %v828
    %v1181 = vadd.f32 %v1149, %v829
    %v1182 = vadd.f32 %v1150, %v830
    %v1183 = vadd.f32 %v1151, %v831
    %v1184 = vadd.f32 %v1152, %v832
    %v1185 = vadd.f32 %v1153, %v833
    %v1186 = vadd.f32 %v1154, %v834
    %v1187 = vadd.f32 %v1155, %v835
    %v1188 = vadd.f32 %v1156, %v836
    %v1189 = vadd.f32 %v1157, %v837
    %v1190 = vadd.f32 %v1158, %v838
    %v1191 = vadd.f32 %v1159, %v839
    %v1192 = vadd.f32 %v1160, %v840
    %v1193 = vadd.f32 %v1161, %v841
    %v1194 = vadd.f32 %v1162, %v842
    %v1195 = vadd.f32 %v1163, %v843
    %v1196 = vadd.f32 %v1164, %v844
    %v1197 = vadd.f32 %v1165, %v845
    %v1198 = vadd.f32 %v1166, %v846
    %v1199 = vlog2.pop %v1103
    %v1200 = vmul.f32 %v1199, 0.6931472
    %v1201 = vlog2.pop %v1104
    %v1202 = vmul.f32 %v1201, 0.6931472
    %v1203 = vlog2.pop %v1105
    %v1204 = vmul.f32 %v1203, 0.6931472
    %v1205 = vlog2.pop %v1106
    %v1206 = vmul.f32 %v1205, 0.6931472
    %v1207 = vlog2.pop %v1107
    %v1208 = vmul.f32 %v1207, 0.6931472
    %v1209 = vlog2.pop %v1108
    %v1210 = vmul.f32 %v1209, 0.6931472
    %v1211 = vlog2.pop %v1109
    %v1212 = vmul.f32 %v1211, 0.6931472
    %v1213 = vlog2.pop %v1110
    %v1214 = vmul.f32 %v1213, 0.6931472
    %v1215 = vlog2.pop %v1111
    %v1216 = vmul.f32 %v1215, 0.6931472
    %v1217 = vlog2.pop %v1112
    %v1218 = vmul.f32 %v1217, 0.6931472
    %v1219 = vlog2.pop %v1113
    %v1220 = vmul.f32 %v1219, 0.6931472
    %v1221 = vlog2.pop %v1114
    %v1222 = vmul.f32 %v1221, 0.6931472
    %v1223 = vlog2.pop %v1115
    %v1224 = vmul.f32 %v1223, 0.6931472
    %v1225 = vlog2.pop %v1116
    %v1226 = vmul.f32 %v1225, 0.6931472
    %v1227 = vlog2.pop %v1117
    %v1228 = vmul.f32 %v1227, 0.6931472
    %v1229 = vlog2.pop %v1118
    %v1230 = vmul.f32 %v1229, 0.6931472
    %v1231 = vlog2.pop %v1119
    %v1232 = vmul.f32 %v1231, 0.6931472
    %v1233 = vlog2.pop %v1120
    %v1234 = vmul.f32 %v1233, 0.6931472
    %v1235 = vlog2.pop %v1121
    %v1236 = vmul.f32 %v1235, 0.6931472
    %v1237 = vlog2.pop %v1122
    %v1238 = vmul.f32 %v1237, 0.6931472
    %v1239 = vlog2.pop %v1123
    %v1240 = vmul.f32 %v1239, 0.6931472
    %v1241 = vlog2.pop %v1124
    %v1242 = vmul.f32 %v1241, 0.6931472
    %v1243 = vlog2.pop %v1125
    %v1244 = vmul.f32 %v1243, 0.6931472
    %v1245 = vlog2.pop %v1126
    %v1246 = vmul.f32 %v1245, 0.6931472
    %v1247 = vlog2.pop %v1127
    %v1248 = vmul.f32 %v1247, 0.6931472
    %v1249 = vlog2.pop %v1128
    %v1250 = vmul.f32 %v1249, 0.6931472
    %v1251 = vlog2.pop %v1129
    %v1252 = vmul.f32 %v1251, 0.6931472
    %v1253 = vlog2.pop %v1130
    %v1254 = vmul.f32 %v1253, 0.6931472
    %v1255 = vlog2.pop %v1131
    %v1256 = vmul.f32 %v1255, 0.6931472
    %v1257 = vlog2.pop %v1132
    %v1258 = vmul.f32 %v1257, 0.6931472
    %v1259 = vlog2.pop %v1133
    %v1260 = vmul.f32 %v1259, 0.6931472
    %v1261 = vlog2.pop %v1134
    %v1262 = vmul.f32 %v1261, 0.6931472
    %v1263 = vadd.f32 %v1167, %v1200
    %v1264 = vadd.f32 %v1168, %v1202
    %v1265 = vadd.f32 %v1169, %v1204
    %v1266 = vadd.f32 %v1170, %v1206
    %v1267 = vadd.f32 %v1171, %v1208
    %v1268 = vadd.f32 %v1172, %v1210
    %v1269 = vadd.f32 %v1173, %v1212
    %v1270 = vadd.f32 %v1174, %v1214
    %v1271 = vadd.f32 %v1175, %v1216
    %v1272 = vadd.f32 %v1176, %v1218
    %v1273 = vadd.f32 %v1177, %v1220
    %v1274 = vadd.f32 %v1178, %v1222
    %v1275 = vadd.f32 %v1179, %v1224
    %v1276 = vadd.f32 %v1180, %v1226
    %v1277 = vadd.f32 %v1181, %v1228
    %v1278 = vadd.f32 %v1182, %v1230
    %v1279 = vadd.f32 %v1183, %v1232
    %v1280 = vadd.f32 %v1184, %v1234
    %v1281 = vadd.f32 %v1185, %v1236
    %v1282 = vadd.f32 %v1186, %v1238
    %v1283 = vadd.f32 %v1187, %v1240
    %v1284 = vadd.f32 %v1188, %v1242
    %v1285 = vadd.f32 %v1189, %v1244
    %v1286 = vadd.f32 %v1190, %v1246
    %v1287 = vadd.f32 %v1191, %v1248
    %v1288 = vadd.f32 %v1192, %v1250
    %v1289 = vadd.f32 %v1193, %v1252
    %v1290 = vadd.f32 %v1194, %v1254
    %v1291 = vadd.f32 %v1195, %v1256
    %v1292 = vadd.f32 %v1196, %v1258
    %v1293 = vadd.f32 %v1197, %v1260
    %v1294 = vadd.f32 %v1198, %v1262
    %v1327 = vlaneseq
    %v1328 = vand.u32 %v1327, 127
    %v1329 = vlaneseq
    %v1330 = vshrl.u32 %v1329, 7
    %v1331 = vsub.s32 %v1328, %v1330
    %v1332 = vrot.slane %v1263, %v1331
    %v1333 = vadd.s32 %v1328, 4294967288
    %v1334 = vlaneseq
    %v1335 = vshrl.u32 %v1334, 7
    %v1336 = vsub.s32 %v1333, %v1335
    %v1337 = vrot.slane %v1264, %v1336
    %vm1338 = vcmask 130112
    %v1339 = vsel %vm1338, %v1337, %v1332
    %v1340 = vadd.s32 %v1328, 4294967280
    %v1341 = vlaneseq
    %v1342 = vshrl.u32 %v1341, 7
    %v1343 = vsub.s32 %v1340, %v1342
    %v1344 = vrot.slane %v1265, %v1343
    %vm1345 = vcmask 195712
    %v1346 = vsel %vm1345, %v1344, %v1339
    %v1347 = vadd.s32 %v1328, 4294967272
    %v1348 = vlaneseq
    %v1349 = vshrl.u32 %v1348, 7
    %v1350 = vsub.s32 %v1347, %v1349
    %v1351 = vrot.slane %v1266, %v1350
    %vm1352 = vcmask 261312
    %v1353 = vsel %vm1352, %v1351, %v1346
    %v1354 = vadd.s32 %v1328, 4294967264
    %v1355 = vlaneseq
    %v1356 = vshrl.u32 %v1355, 7
    %v1357 = vsub.s32 %v1354, %v1356
    %v1358 = vrot.slane %v1267, %v1357
    %vm1359 = vcmask 326912
    %v1360 = vsel %vm1359, %v1358, %v1353
    %v1361 = vadd.s32 %v1328, 4294967256
    %v1362 = vlaneseq
    %v1363 = vshrl.u32 %v1362, 7
    %v1364 = vsub.s32 %v1361, %v1363
    %v1365 = vrot.slane %v1268, %v1364
    %vm1366 = vcmask 392512
    %v1367 = vsel %vm1366, %v1365, %v1360
    %v1368 = vadd.s32 %v1328, 4294967248
    %v1369 = vlaneseq
    %v1370 = vshrl.u32 %v1369, 7
    %v1371 = vsub.s32 %v1368, %v1370
    %v1372 = vrot.slane %v1269, %v1371
    %vm1373 = vcmask 458112
    %v1374 = vsel %vm1373, %v1372, %v1367
    %v1375 = vadd.s32 %v1328, 4294967240
    %v1376 = vlaneseq
    %v1377 = vshrl.u32 %v1376, 7
    %v1378 = vsub.s32 %v1375, %v1377
    %v1379 = vrot.slane %v1270, %v1378
    %vm1380 = vcmask 523712
    %v1381 = vsel %vm1380, %v1379, %v1374
    %v1382 = vadd.s32 %v1328, 4294967232
    %v1383 = vlaneseq
    %v1384 = vshrl.u32 %v1383, 7
    %v1385 = vsub.s32 %v1382, %v1384
    %v1386 = vrot.slane %v1271, %v1385
    %vm1387 = vcmask 589312
    %v1388 = vsel %vm1387, %v1386, %v1381
    %v1389 = vadd.s32 %v1328, 4294967224
    %v1390 = vlaneseq
    %v1391 = vshrl.u32 %v1390, 7
    %v1392 = vsub.s32 %v1389, %v1391
    %v1393 = vrot.slane %v1272, %v1392
    %vm1394 = vcmask 654912
    %v1395 = vsel %vm1394, %v1393, %v1388
    %v1396 = vadd.s32 %v1328, 4294967216
    %v1397 = vlaneseq
    %v1398 = vshrl.u32 %v1397, 7
    %v1399 = vsub.s32 %v1396, %v1398
    %v1400 = vrot.slane %v1273, %v1399
    %vm1401 = vcmask 720512
    %v1402 = vsel %vm1401, %v1400, %v1395
    %v1403 = vadd.s32 %v1328, 4294967208
    %v1404 = vlaneseq
    %v1405 = vshrl.u32 %v1404, 7
    %v1406 = vsub.s32 %v1403, %v1405
    %v1407 = vrot.slane %v1274, %v1406
    %vm1408 = vcmask 786112
    %v1409 = vsel %vm1408, %v1407, %v1402
    %v1410 = vadd.s32 %v1328, 4294967200
    %v1411 = vlaneseq
    %v1412 = vshrl.u32 %v1411, 7
    %v1413 = vsub.s32 %v1410, %v1412
    %v1414 = vrot.slane %v1275, %v1413
    %vm1415 = vcmask 851712
    %v1416 = vsel %vm1415, %v1414, %v1409
    %v1417 = vadd.s32 %v1328, 4294967192
    %v1418 = vlaneseq
    %v1419 = vshrl.u32 %v1418, 7
    %v1420 = vsub.s32 %v1417, %v1419
    %v1421 = vrot.slane %v1276, %v1420
    %vm1422 = vcmask 917312
    %v1423 = vsel %vm1422, %v1421, %v1416
    %v1424 = vadd.s32 %v1328, 4294967184
    %v1425 = vlaneseq
    %v1426 = vshrl.u32 %v1425, 7
    %v1427 = vsub.s32 %v1424, %v1426
    %v1428 = vrot.slane %v1277, %v1427
    %vm1429 = vcmask 982912
    %v1430 = vsel %vm1429, %v1428, %v1423
    %v1431 = vadd.s32 %v1328, 4294967176
    %v1432 = vlaneseq
    %v1433 = vshrl.u32 %v1432, 7
    %v1434 = vsub.s32 %v1431, %v1433
    %v1435 = vrot.slane %v1278, %v1434
    %vm1436 = vcmask 1048512
    %v1437 = vsel %vm1436, %v1435, %v1430
    %v1438 = vlaneseq
    %v1439 = vshrl.u32 %v1438, 7
    %v1440 = vsub.s32 %v1328, %v1439
    %v1441 = vrot.slane %v1279, %v1440
    %v1442 = vlaneseq
    %v1443 = vshrl.u32 %v1442, 7
    %v1444 = vsub.s32 %v1333, %v1443
    %v1445 = vrot.slane %v1280, %v1444
    %v1446 = vsel %vm1338, %v1445, %v1441
    %v1447 = vlaneseq
    %v1448 = vshrl.u32 %v1447, 7
    %v1449 = vsub.s32 %v1340, %v1448
    %v1450 = vrot.slane %v1281, %v1449
    %v1451 = vsel %vm1345, %v1450, %v1446
    %v1452 = vlaneseq
    %v1453 = vshrl.u32 %v1452, 7
    %v1454 = vsub.s32 %v1347, %v1453
    %v1455 = vrot.slane %v1282, %v1454
    %v1456 = vsel %vm1352, %v1455, %v1451
    %v1457 = vlaneseq
    %v1458 = vshrl.u32 %v1457, 7
    %v1459 = vsub.s32 %v1354, %v1458
    %v1460 = vrot.slane %v1283, %v1459
    %v1461 = vsel %vm1359, %v1460, %v1456
    %v1462 = vlaneseq
    %v1463 = vshrl.u32 %v1462, 7
    %v1464 = vsub.s32 %v1361, %v1463
    %v1465 = vrot.slane %v1284, %v1464
    %v1466 = vsel %vm1366, %v1465, %v1461
    %v1467 = vlaneseq
    %v1468 = vshrl.u32 %v1467, 7
    %v1469 = vsub.s32 %v1368, %v1468
    %v1470 = vrot.slane %v1285, %v1469
    %v1471 = vsel %vm1373, %v1470, %v1466
    %v1472 = vlaneseq
    %v1473 = vshrl.u32 %v1472, 7
    %v1474 = vsub.s32 %v1375, %v1473
    %v1475 = vrot.slane %v1286, %v1474
    %v1476 = vsel %vm1380, %v1475, %v1471
    %v1477 = vlaneseq
    %v1478 = vshrl.u32 %v1477, 7
    %v1479 = vsub.s32 %v1382, %v1478
    %v1480 = vrot.slane %v1287, %v1479
    %v1481 = vsel %vm1387, %v1480, %v1476
    %v1482 = vlaneseq
    %v1483 = vshrl.u32 %v1482, 7
    %v1484 = vsub.s32 %v1389, %v1483
    %v1485 = vrot.slane %v1288, %v1484
    %v1486 = vsel %vm1394, %v1485, %v1481
    %v1487 = vlaneseq
    %v1488 = vshrl.u32 %v1487, 7
    %v1489 = vsub.s32 %v1396, %v1488
    %v1490 = vrot.slane %v1289, %v1489
    %v1491 = vsel %vm1401, %v1490, %v1486
    %v1492 = vlaneseq
    %v1493 = vshrl.u32 %v1492, 7
    %v1494 = vsub.s32 %v1403, %v1493
    %v1495 = vrot.slane %v1290, %v1494
    %v1496 = vsel %vm1408, %v1495, %v1491
    %v1497 = vlaneseq
    %v1498 = vshrl.u32 %v1497, 7
    %v1499 = vsub.s32 %v1410, %v1498
    %v1500 = vrot.slane %v1291, %v1499
    %v1501 = vsel %vm1415, %v1500, %v1496
    %v1502 = vlaneseq
    %v1503 = vshrl.u32 %v1502, 7
    %v1504 = vsub.s32 %v1417, %v1503
    %v1505 = vrot.slane %v1292, %v1504
    %v1506 = vsel %vm1422, %v1505, %v1501
    %v1507 = vlaneseq
    %v1508 = vshrl.u32 %v1507, 7
    %v1509 = vsub.s32 %v1424, %v1508
    %v1510 = vrot.slane %v1293, %v1509
    %v1511 = vsel %vm1429, %v1510, %v1506
    %v1512 = vlaneseq
    %v1513 = vshrl.u32 %v1512, 7
    %v1514 = vsub.s32 %v1431, %v1513
    %v1515 = vrot.slane %v1294, %v1514
    %v1516 = vsel %vm1436, %v1515, %v1511
    %vm1517 = vcmask 1041409
    %v1518 = vsel %vm1517, %v1516, %v1437
    %1520 = vst [vmem:[#allocation2] sm:$0x3] %v1518
    // Predicated region
    $region10: #{tpu_custom_call.1} parent=1 // pred_check
      _
    $region11: #{tpu_custom_call.1} parent=1 // pred_check_branch
      %1522 = sbr.rel (0) target = $region13
    $region12: #{tpu_custom_call.1} parent=1 // pred_region
      %s1524 = ssub.s32 32, 32
      %1525 = vsyncadd [#allocation3], %s1524
      %s1527 = sshll.u32 [#allocation2], 4
      %s1528 = int_to_ptr.vmem [resolvable:$true] %s1527
      %1530 = dma.vmem_to_hbm [thread:$0]  %s1528, 32, %s2, [#allocation3]
    $region13: #{tpu_custom_call.1} parent=1 // pred_fallthru
      _
    // Predicated region
    $region14: #{tpu_custom_call.1} parent=1 // pred_check
      _
    $region15: #{tpu_custom_call.1} parent=1 // pred_check_branch
      %1532 = sbr.rel (0) target = $region17
    $region16: #{tpu_custom_call.1} parent=1 // pred_region
      %1533 = dma.done [#allocation3], 32
    $region17: #{tpu_custom_call.1} parent=1 // pred_fallthru
      _
    %1534 = vsyncpa [#allocation3], 1

</llo_original>
